<compile_context>
chip_gen: v6e
topology: v6e:2x2x1
jax: 0.10.0
libtpu: 0.0.40
codegen_flags: <defaults>
</compile_context>

<pallas_src>
import functools

import numpy as np
import jax
import jax.numpy as jnp
from jax.experimental import pallas as pl
from jax.experimental.pallas import tpu as pltpu

EPS = float(np.finfo(np.float32).eps)          # torch.finfo(torch.float32).eps
AMIN = 1e-10                                   # torchaudio AmplitudeToDB amin
DB_MULT = 10.0                                 # stype='power'


def _round_up(a, m):
    return (a + m - 1) // m * m


# ---------------------------------------------------------------------------
# Deterministic parameter construction (mirrors torchaudio MelScale + hann STFT)
# ---------------------------------------------------------------------------
def melscale_fbanks(n_freqs, f_min, f_max, n_mels, sample_rate):
    """HTK mel scale, slaney norm — same as torchaudio MelScale(norm='slaney')."""
    all_freqs = np.linspace(0.0, sample_rate // 2, n_freqs)

    def hz_to_mel(f):
        return 2595.0 * np.log10(1.0 + f / 700.0)

    def mel_to_hz(m):
        return 700.0 * (10.0 ** (m / 2595.0) - 1.0)

    m_pts = np.linspace(hz_to_mel(f_min), hz_to_mel(f_max), n_mels + 2)
    f_pts = mel_to_hz(m_pts)
    f_diff = f_pts[1:] - f_pts[:-1]                     # (n_mels + 1,)
    slopes = f_pts[None, :] - all_freqs[:, None]        # (n_freqs, n_mels + 2)
    down = (-1.0 * slopes[:, :-2]) / f_diff[:-1]
    up = slopes[:, 2:] / f_diff[1:]
    fb = np.maximum(0.0, np.minimum(down, up))          # (n_freqs, n_mels)
    enorm = 2.0 / (f_pts[2 : n_mels + 2] - f_pts[:n_mels])
    fb = fb * enorm[None, :]
    return fb.astype(np.float32)


def make_dft_matrix(nfft, n_f, f_pad):
    """Windowed real-DFT matrix [cos | -sin] with n_f freq bins, zero-padded to f_pad.

    X_re[k] =  sum_n x[n] w[n] cos(2 pi k n / N)
    X_im[k] = -sum_n x[n] w[n] sin(2 pi k n / N)   (minus folded into the matrix)
    Padded frequency columns are zero -> contribute nothing downstream.
    """
    n = np.arange(nfft)
    k = np.arange(n_f)
    window = 0.5 * (1.0 - np.cos(2.0 * np.pi * n / nfft))   # periodic hann
    ang = 2.0 * np.pi * np.outer(n, k) / nfft
    dft = np.zeros((nfft, 2 * f_pad), np.float32)
    dft[:, :n_f] = window[:, None] * np.cos(ang)
    dft[:, f_pad : f_pad + n_f] = -(window[:, None] * np.sin(ang))
    return dft


# ---------------------------------------------------------------------------
# Pallas kernel: fused DFT + power/mel/log + intensity-vector mel (one time tile)
# ---------------------------------------------------------------------------
def _logmel_iv_kernel(frames_ref, dft_ref, mel_ref, out_ref, buf_ref, *, tb, fp):
    # frames_ref: (1, 4, tb, nfft) bf16   dft_ref: (nfft, 2*fp) bf16
    # mel_ref:    (fp, mpad)       bf16   out_ref: (1, 7, tb, mpad) f32
    # buf_ref:    (7*tb, fp)       bf16   fused mel-matmul LHS scratch
    nfft = frames_ref.shape[3]
    mpad = out_ref.shape[3]
    fr = frames_ref[0].reshape(4 * tb, nfft)       # leading-dim merge, tile-aligned

    # One wide bf16 MXU matmul for all 4 channels: [real | imag] spectra.
    spec = jnp.dot(fr, dft_ref[...], preferred_element_type=jnp.float32)  # (4tb, 2fp)
    re = spec[:, :fp]                                             # (4*tb, fp) f32
    im = spec[:, fp:]                                             # (4*tb, fp) f32

    # Power spectra of the 4 mics -> rows 0..4tb of the fused mel LHS.
    power = re * re + im * im                                     # (4*tb, fp)
    buf_ref[0 : 4 * tb, :] = power.astype(jnp.bfloat16)

    # Intensity vector (channel 0 is the pressure reference) -> rows 4tb..7tb.
    pr = re[0:tb]
    pi = im[0:tb]
    iv_x = pr * re[tb : 2 * tb] + pi * im[tb : 2 * tb]
    iv_y = pr * re[2 * tb : 3 * tb] + pi * im[2 * tb : 3 * tb]
    iv_z = pr * re[3 * tb : 4 * tb] + pi * im[3 * tb : 4 * tb]
    normal = jnp.sqrt(iv_x * iv_x + iv_y * iv_y + iv_z * iv_z) + EPS
    inv = pl.reciprocal(normal, approx=True)                      # EUP slot
    inv = inv * (2.0 - normal * inv)                              # 1 Newton step -> ~exact 1/normal
    buf_ref[4 * tb : 5 * tb, :] = (iv_x * inv).astype(jnp.bfloat16)
    buf_ref[5 * tb : 6 * tb, :] = (iv_y * inv).astype(jnp.bfloat16)
    buf_ref[6 * tb : 7 * tb, :] = (iv_z * inv).astype(jnp.bfloat16)

    # Single fused bf16 mel matmul for power (4 mics) + normalized IV (3 axes).
    melres = jnp.dot(buf_ref[...], mel_ref[...], preferred_element_type=jnp.float32)  # (7tb, mpad)
    logmel = DB_MULT * jnp.log10(jnp.maximum(melres[0 : 4 * tb], AMIN))
    out_ref[0, 0:4, :, :] = logmel.reshape(4, tb, mpad)
    out_ref[0, 4:7, :, :] = melres[4 * tb : 7 * tb].reshape(3, tb, mpad)


# ---------------------------------------------------------------------------
# Wrapper: framing (glue), T tiling, lane padding, pallas_call
# ---------------------------------------------------------------------------
def _pick_tiling():
    """Per-generation tile size / VMEM limit (v7x has only 64 MiB VMEM)."""
    kind = ""
    try:
        kind = jax.devices()[0].device_kind.lower()
    except Exception:
        pass
    if "v7" in kind:
        return 256, 48 * 1024 * 1024
    if "v5" in kind or "v6" in kind:
        return 512, 96 * 1024 * 1024
    return 256, 48 * 1024 * 1024


def logmel_iv_extractor(x, *, nfft, hoplen, n_mels, sample_rate,
                        t_block=None, vmem_limit_bytes=None):
    """x: (B, 4, L) float32  ->  (B, 7, T, n_mels) float32."""
    B, C, L = x.shape
    assert C == 4
    n_freqs = nfft // 2 + 1
    T = L // hoplen + 1                                    # torch.stft center=True

    tb_default, vmem_default = _pick_tiling()
    if t_block is None:
        t_block = tb_default
    if vmem_limit_bytes is None:
        vmem_limit_bytes = vmem_default

    # --- centered STFT framing with reflect padding (glue, bf16 before gather) ---
    # TODO(synk): build the overlapping frames inside the kernel from the padded
    # waveform (memory_space=pl.ANY + manual DMA of one contiguous span per tile)
    # to avoid the nfft/hoplen HBM blow-up of materializing frames.
    pad = nfft // 2
    xb = x.astype(jnp.bfloat16)
    xp = jnp.pad(xb, ((0, 0), (0, 0), (pad, pad)), mode="reflect")
    starts = np.arange(T) * hoplen
    idx = starts[:, None] + np.arange(nfft)[None, :]       # (T, nfft) static
    frames = xp[:, :, idx]                                  # (B, 4, T, nfft) bf16

    # --- tile the time axis (keep natural (B, 4, T, nfft) layout, no transpose) ---
    tb = min(t_block, _round_up(T, 16))                     # mult of 16: bf16-aligned slices
    if B == 1 and tb > 16 and _round_up(T, tb) // tb < 2:
        tb = max(16, _round_up(tb // 2, 16))                # keep both v7x TCs busy
    Tp = _round_up(T, tb)
    nT = Tp // tb
    if Tp != T:
        frames = jnp.pad(frames, ((0, 0), (0, 0), (0, Tp - T), (0, 0)))

    # --- constants: windowed DFT [cos|-sin] and mel fbank (bf16), lane-padded ---
    fbank = melscale_fbanks(n_freqs, 20.0, sample_rate / 2.0, n_mels, sample_rate)
    # Nyquist bin has exactly zero weight in every slaney filter when f_max = sr/2,
    # so it can be dropped from the DFT/mel matmuls without changing the output.
    n_f = n_freqs - 1 if bool(np.all(fbank[-1] == 0.0)) else n_freqs
    Fp = _round_up(n_f, 128)
    Mpad = _round_up(n_mels, 128)
    dft = jnp.asarray(make_dft_matrix(nfft, n_f, Fp), dtype=jnp.bfloat16)   # (nfft, 2*Fp)
    melW_np = np.zeros((Fp, Mpad), np.float32)
    melW_np[:n_f, :n_mels] = fbank[:n_f]
    melW = jnp.asarray(melW_np, dtype=jnp.bfloat16)                          # (Fp, Mpad)

    kernel = functools.partial(_logmel_iv_kernel, tb=tb, fp=Fp)
    out = pl.pallas_call(
        kernel,
        out_shape=jax.ShapeDtypeStruct((B, 7, Tp, Mpad), jnp.float32),
        grid=(B, nT),
        in_specs=[
            pl.BlockSpec((1, 4, tb, nfft), lambda b, t: (b, 0, t, 0)),
            pl.BlockSpec((nfft, 2 * Fp), lambda b, t: (0, 0)),
            pl.BlockSpec((Fp, Mpad), lambda b, t: (0, 0)),
        ],
        out_specs=pl.BlockSpec((1, 7, tb, Mpad), lambda b, t: (b, 0, t, 0)),
        scratch_shapes=[pltpu.VMEM((7 * tb, Fp), jnp.bfloat16)],
        compiler_params=pltpu.CompilerParams(
            dimension_semantics=("parallel", "parallel"),
            vmem_limit_bytes=vmem_limit_bytes,
        ),
    )(frames, dft, melW)

    # Output already laid out as (B, 7, T, mel); just trim padding.
    return out[:, :, :T, :n_mels]


if __name__ == "__main__":
    # small deterministic config: nfft=64 -> 33 freq bins, hop=16, 16 mel bins
    cfg = dict(nfft=64, hoplen=16, n_mels=16, sample_rate=16000)
    B, C, L = 2, 4, 112                                    # -> T = 112//16 + 1 = 8

    key = jax.random.PRNGKey(0)
    x = jax.random.normal(key, (B, C, L), dtype=jnp.float32)

    out = logmel_iv_extractor(x, **cfg)
    out = jax.block_until_ready(out)

    assert out.shape == (B, 7, L // cfg["hoplen"] + 1, cfg["n_mels"])
    assert bool(jnp.all(jnp.isfinite(out)))
    print("KERNEL_OK")
</pallas_src>

<mosaic_0001>
module attributes {stable_mosaic.version = 11 : i64} {
  func.func @_logmel_iv_kernel(%arg0: i32, %arg1: i32, %arg2: memref<1x4x16x64xbf16, #tpu.memory_space<vmem>>, %arg3: memref<64x256xbf16, #tpu.memory_space<vmem>>, %arg4: memref<128x128xbf16, #tpu.memory_space<vmem>>, %arg5: memref<1x7x16x128xf32, #tpu.memory_space<vmem>>, %arg6: memref<112x128xbf16, #tpu.memory_space<vmem>>) attributes {dimension_semantics = [#tpu.dimension_semantics<parallel>, #tpu.dimension_semantics<parallel>], iteration_bounds = array<i64: 2, 1>, scalar_prefetch = 0 : i64, scratch_operands = 1 : i64, tpu.core_type = #tpu.core_type<tc>, window_params = [{transform_indices = @transform_0, window_bounds = array<i64: 1, 4, 16, 64>}, {pipeline_mode = #tpu.pipeline_mode<synchronous>, transform_indices = @transform_1, window_bounds = array<i64: 64, 256>}, {pipeline_mode = #tpu.pipeline_mode<synchronous>, transform_indices = @transform_2, window_bounds = array<i64: 128, 128>}, {transform_indices = @transform_3, window_bounds = array<i64: 1, 7, 16, 128>}]} {
    %c0 = arith.constant 0 : index
    %c0_0 = arith.constant 0 : index
    %c0_1 = arith.constant 0 : index
    %c0_2 = arith.constant 0 : index
    %0 = vector.load %arg2[%c0, %c0_0, %c0_1, %c0_2] : memref<1x4x16x64xbf16, #tpu.memory_space<vmem>>, vector<1x4x16x64xbf16>
    %1 = vector.shape_cast %0 : vector<1x4x16x64xbf16> to vector<4x16x64xbf16>
    %2 = vector.shape_cast %1 : vector<4x16x64xbf16> to vector<64x64xbf16>
    %c0_3 = arith.constant 0 : index
    %c0_4 = arith.constant 0 : index
    %3 = vector.load %arg3[%c0_3, %c0_4] : memref<64x256xbf16, #tpu.memory_space<vmem>>, vector<64x256xbf16>
    %cst = arith.constant dense<0.000000e+00> : vector<64x256xf32>
    %4 = tpu.matmul %2, %3, %cst {dimension_numbers = #tpu.dot_dimension_numbers<[1], [0], [0], [1], [0, 0, 1, 1], [], []>} : vector<64x64xbf16>, vector<64x256xbf16>, vector<64x256xf32> -> vector<64x256xf32>
    %5 = vector.extract_strided_slice %4 {offsets = [0, 0], sizes = [64, 128], strides = [1, 1]} : vector<64x256xf32> to vector<64x128xf32>
    %6 = vector.extract_strided_slice %4 {offsets = [0, 128], sizes = [64, 128], strides = [1, 1]} : vector<64x256xf32> to vector<64x128xf32>
    %7 = arith.mulf %5, %5 : vector<64x128xf32>
    %8 = arith.mulf %6, %6 : vector<64x128xf32>
    %9 = arith.addf %7, %8 : vector<64x128xf32>
    %10 = arith.truncf %9 : vector<64x128xf32> to vector<64x128xbf16>
    %c0_5 = arith.constant 0 : index
    %c0_6 = arith.constant 0 : index
    %11 = vector.load %arg6[%c0_5, %c0_6] : memref<112x128xbf16, #tpu.memory_space<vmem>>, vector<64x128xbf16>
    tpu.vector_store %arg6[%c0_5, %c0_6], %10 {strides = array<i32>} : memref<112x128xbf16, #tpu.memory_space<vmem>>, vector<64x128xbf16>,
    %12 = vector.extract_strided_slice %5 {offsets = [0, 0], sizes = [16, 128], strides = [1, 1]} : vector<64x128xf32> to vector<16x128xf32>
    %13 = vector.extract_strided_slice %6 {offsets = [0, 0], sizes = [16, 128], strides = [1, 1]} : vector<64x128xf32> to vector<16x128xf32>
    %14 = vector.extract_strided_slice %5 {offsets = [16, 0], sizes = [16, 128], strides = [1, 1]} : vector<64x128xf32> to vector<16x128xf32>
    %15 = arith.mulf %12, %14 : vector<16x128xf32>
    %16 = vector.extract_strided_slice %6 {offsets = [16, 0], sizes = [16, 128], strides = [1, 1]} : vector<64x128xf32> to vector<16x128xf32>
    %17 = arith.mulf %13, %16 : vector<16x128xf32>
    %18 = arith.addf %15, %17 : vector<16x128xf32>
    %19 = vector.extract_strided_slice %5 {offsets = [32, 0], sizes = [16, 128], strides = [1, 1]} : vector<64x128xf32> to vector<16x128xf32>
    %20 = arith.mulf %12, %19 : vector<16x128xf32>
    %21 = vector.extract_strided_slice %6 {offsets = [32, 0], sizes = [16, 128], strides = [1, 1]} : vector<64x128xf32> to vector<16x128xf32>
    %22 = arith.mulf %13, %21 : vector<16x128xf32>
    %23 = arith.addf %20, %22 : vector<16x128xf32>
    %24 = vector.extract_strided_slice %5 {offsets = [48, 0], sizes = [16, 128], strides = [1, 1]} : vector<64x128xf32> to vector<16x128xf32>
    %25 = arith.mulf %12, %24 : vector<16x128xf32>
    %26 = vector.extract_strided_slice %6 {offsets = [48, 0], sizes = [16, 128], strides = [1, 1]} : vector<64x128xf32> to vector<16x128xf32>
    %27 = arith.mulf %13, %26 : vector<16x128xf32>
    %28 = arith.addf %25, %27 : vector<16x128xf32>
    %29 = arith.mulf %18, %18 : vector<16x128xf32>
    %30 = arith.mulf %23, %23 : vector<16x128xf32>
    %31 = arith.addf %29, %30 : vector<16x128xf32>
    %32 = arith.mulf %28, %28 : vector<16x128xf32>
    %33 = arith.addf %31, %32 : vector<16x128xf32>
    %34 = math.sqrt %33 : vector<16x128xf32>
    %cst_7 = arith.constant 1.1920929E-7 : f32
    %35 = vector.broadcast %cst_7 : f32 to vector<16x128xf32>
    %36 = arith.addf %34, %35 : vector<16x128xf32>
    %37 = tpu.reciprocal %36 {approx = true} : vector<16x128xf32> -> vector<16x128xf32>
    %38 = arith.mulf %36, %37 : vector<16x128xf32>
    %cst_8 = arith.constant 2.000000e+00 : f32
    %39 = vector.broadcast %cst_8 : f32 to vector<16x128xf32>
    %40 = arith.subf %39, %38 : vector<16x128xf32>
    %41 = arith.mulf %37, %40 : vector<16x128xf32>
    %42 = arith.mulf %18, %41 : vector<16x128xf32>
    %43 = arith.truncf %42 : vector<16x128xf32> to vector<16x128xbf16>
    %c64 = arith.constant 64 : index
    %c0_9 = arith.constant 0 : index
    %44 = vector.load %arg6[%c64, %c0_9] : memref<112x128xbf16, #tpu.memory_space<vmem>>, vector<16x128xbf16>
    tpu.vector_store %arg6[%c64, %c0_9], %43 {strides = array<i32>} : memref<112x128xbf16, #tpu.memory_space<vmem>>, vector<16x128xbf16>,
    %45 = arith.mulf %23, %41 : vector<16x128xf32>
    %46 = arith.truncf %45 : vector<16x128xf32> to vector<16x128xbf16>
    %c80 = arith.constant 80 : index
    %c0_10 = arith.constant 0 : index
    %47 = vector.load %arg6[%c80, %c0_10] : memref<112x128xbf16, #tpu.memory_space<vmem>>, vector<16x128xbf16>
    tpu.vector_store %arg6[%c80, %c0_10], %46 {strides = array<i32>} : memref<112x128xbf16, #tpu.memory_space<vmem>>, vector<16x128xbf16>,
    %48 = arith.mulf %28, %41 : vector<16x128xf32>
    %49 = arith.truncf %48 : vector<16x128xf32> to vector<16x128xbf16>
    %c96 = arith.constant 96 : index
    %c0_11 = arith.constant 0 : index
    %50 = vector.load %arg6[%c96, %c0_11] : memref<112x128xbf16, #tpu.memory_space<vmem>>, vector<16x128xbf16>
    tpu.vector_store %arg6[%c96, %c0_11], %49 {strides = array<i32>} : memref<112x128xbf16, #tpu.memory_space<vmem>>, vector<16x128xbf16>,
    %c0_12 = arith.constant 0 : index
    %c0_13 = arith.constant 0 : index
    %51 = vector.load %arg6[%c0_12, %c0_13] : memref<112x128xbf16, #tpu.memory_space<vmem>>, vector<112x128xbf16>
    %c0_14 = arith.constant 0 : index
    %c0_15 = arith.constant 0 : index
    %52 = vector.load %arg4[%c0_14, %c0_15] : memref<128x128xbf16, #tpu.memory_space<vmem>>, vector<128x128xbf16>
    %cst_16 = arith.constant dense<0.000000e+00> : vector<112x128xf32>
    %53 = tpu.matmul %51, %52, %cst_16 {dimension_numbers = #tpu.dot_dimension_numbers<[1], [0], [0], [1], [0, 0, 1, 1], [], []>} : vector<112x128xbf16>, vector<128x128xbf16>, vector<112x128xf32> -> vector<112x128xf32>
    %54 = vector.extract_strided_slice %53 {offsets = [0, 0], sizes = [64, 128], strides = [1, 1]} : vector<112x128xf32> to vector<64x128xf32>
    %cst_17 = arith.constant 1.000000e-10 : f32
    %55 = vector.broadcast %cst_17 : f32 to vector<64x128xf32>
    %56 = arith.maximumf %54, %55 : vector<64x128xf32>
    %57 = math.log %56 : vector<64x128xf32>
    %cst_18 = arith.constant 0.434294492 : f32
    %58 = vector.broadcast %cst_18 : f32 to vector<64x128xf32>
    %59 = arith.mulf %57, %58 : vector<64x128xf32>
    %cst_19 = arith.constant 1.000000e+01 : f32
    %60 = vector.broadcast %cst_19 : f32 to vector<64x128xf32>
    %61 = arith.mulf %60, %59 : vector<64x128xf32>
    %62 = vector.shape_cast %61 : vector<64x128xf32> to vector<4x16x128xf32>
    %c0_20 = arith.constant 0 : index
    %c0_21 = arith.constant 0 : index
    %c0_22 = arith.constant 0 : index
    %c0_23 = arith.constant 0 : index
    %63 = vector.load %arg5[%c0_20, %c0_21, %c0_22, %c0_23] : memref<1x7x16x128xf32, #tpu.memory_space<vmem>>, vector<1x4x16x128xf32>
    %64 = vector.shape_cast %63 : vector<1x4x16x128xf32> to vector<4x16x128xf32>
    %65 = vector.shape_cast %62 : vector<4x16x128xf32> to vector<1x4x16x128xf32>
    tpu.vector_store %arg5[%c0_20, %c0_21, %c0_22, %c0_23], %65 {strides = array<i32>} : memref<1x7x16x128xf32, #tpu.memory_space<vmem>>, vector<1x4x16x128xf32>,
    %66 = vector.extract_strided_slice %53 {offsets = [64, 0], sizes = [48, 128], strides = [1, 1]} : vector<112x128xf32> to vector<48x128xf32>
    %67 = vector.shape_cast %66 : vector<48x128xf32> to vector<3x16x128xf32>
    %c0_24 = arith.constant 0 : index
    %c4 = arith.constant 4 : index
    %c0_25 = arith.constant 0 : index
    %c0_26 = arith.constant 0 : index
    %68 = vector.load %arg5[%c0_24, %c4, %c0_25, %c0_26] : memref<1x7x16x128xf32, #tpu.memory_space<vmem>>, vector<1x3x16x128xf32>
    %69 = vector.shape_cast %68 : vector<1x3x16x128xf32> to vector<3x16x128xf32>
    %70 = vector.shape_cast %67 : vector<3x16x128xf32> to vector<1x3x16x128xf32>
    tpu.vector_store %arg5[%c0_24, %c4, %c0_25, %c0_26], %70 {strides = array<i32>} : memref<1x7x16x128xf32, #tpu.memory_space<vmem>>, vector<1x3x16x128xf32>,
    return
  }
  func.func @transform_0(%arg0: i32, %arg1: i32) -> (i32, i32, i32, i32) {
    %c0_i32 = arith.constant 0 : i32
    %c0_i32_0 = arith.constant 0 : i32
    %c0_i32_1 = arith.constant 0 : i32
    return %arg0, %c0_i32, %arg1, %c0_i32_0 : i32, i32, i32, i32
  }
  func.func @transform_1(%arg0: i32, %arg1: i32) -> (i32, i32) {
    %c0_i32 = arith.constant 0 : i32
    %c0_i32_0 = arith.constant 0 : i32
    %c0_i32_1 = arith.constant 0 : i32
    return %c0_i32, %c0_i32_0 : i32, i32
  }
  func.func @transform_2(%arg0: i32, %arg1: i32) -> (i32, i32) {
    %c0_i32 = arith.constant 0 : i32
    %c0_i32_0 = arith.constant 0 : i32
    %c0_i32_1 = arith.constant 0 : i32
    return %c0_i32, %c0_i32_0 : i32, i32
  }
  func.func @transform_3(%arg0: i32, %arg1: i32) -> (i32, i32, i32, i32) {
    %c0_i32 = arith.constant 0 : i32
    %c0_i32_0 = arith.constant 0 : i32
    %c0_i32_1 = arith.constant 0 : i32
    return %arg0, %c0_i32, %arg1, %c0_i32_0 : i32, i32, i32, i32
  }
}

</mosaic_0001>

<llo_original>
// kernel: tpu_custom_call.1
$region0: #{tpu_custom_call.1}
  #allocation0 [shape = 'u32[]', space=smem, size = 0x4, offset = 0x4, fixed_abs, tag = 'smem constant byte address 0x4 - core index']
  #allocation1 [shape = 'u32[144,128]{1,0:T(1,128)}', space=vmem, size = 0x12000, scoped, tag = 'internal scratch']
  #allocation2 [shape = 'bf16[112,128]{1,0:T(8,128)(2,1)}', space=vmem, size = 0x7000, scoped, tag = 'scratch operand']
  %s0 = inlined_call_operand.hbm [shape: bf16[2,4,16,64], index: 0, kind: input, shape index: {}]
  %s1 = inlined_call_operand.hbm [shape: bf16[64,256], index: 1, kind: input, shape index: {}]
  %s2 = inlined_call_operand.hbm [shape: bf16[128,128], index: 2, kind: input, shape index: {}]
  %s3 = inlined_call_operand.hbm [shape: f32[2,7,16,128], index: 3, kind: output, shape index: {}]
  %s4 = sld [smem:[#allocation0]]
  $region57: #{tpu_custom_call.1} parent=0
    _
  %s6 = ssub.s32 1, %s4
  %s7 = scalar_select 0, %s6, %s4
  $region1: #{tpu_custom_call.1} parent=0
    #allocation3 [shape = 'u8[32768]{0}', space=vmem, size = 0x8000, scoped, tag = 'input window, operand 0']
    #allocation4 [shape = 's32[2]{0}', space=sflag, size = 0x8, scoped, tag = 'scoped memory for tpu_custom_call.1']
    #allocation5 [shape = 's32[2]{0}', space=sflag, size = 0x8, scoped, tag = 'scoped memory for tpu_custom_call.1']
    #allocation6 [shape = 'u8[32768]{0}', space=vmem, size = 0x8000, scoped, tag = 'input window, operand 1, single buffered']
    #allocation7 [shape = 's32[1]{0}', space=sflag, size = 0x4, scoped, tag = 'scoped memory for tpu_custom_call.1']
    #allocation8 [shape = 'u8[32768]{0}', space=vmem, size = 0x8000, scoped, tag = 'input window, operand 2, single buffered']
    #allocation9 [shape = 'u8[114688]{0}', space=vmem, size = 0x1c000, scoped, tag = 'output window, operand 0']
    %8 = vsyncpa [#allocation4], 0
    %s9 = scalar_lea.sflag [#allocation4], 1
    %10 = vsyncpa %s9, 0
    %11 = vsyncpa [#allocation7], 0
    %12 = vsyncpa [#allocation5], 0
    %s13 = scalar_lea.sflag [#allocation5], 1
    %14 = vsyncpa %s13, 0
    loop: start=0, step=1, limit=4
    $region2: #{tpu_custom_call.1} parent=1 // loop_pre_header
      _
    $region3: #{tpu_custom_call.1} parent=1 // loop_header
      %s16 = sphi 0, %s20
      %p17 = scmp.ge.s32.totalorder %s16, 4
      %s23 = sphi 0, %s35
      %s24 = sphi 0, %s31
      %s25 = sphi 0, %s23
      %s26 = sphi 0, %s24
      %s27 = sphi 0, %s25
      %s28 = sphi 0, %s26
      %s40 = sphi 0, %s42
      %s43 = sphi 0, %s40
      %s44 = sphi 0, %s43
      %s60 = sphi 0, %s44
      %s64 = sphi 0, %s64
      %s66 = sphi 0, %s64
      %s67 = sphi 0, %s66
      %s81 = sphi 0, %s67
      %s85 = sphi 0, %s85
      %s87 = sphi 0, %s85
      %s88 = sphi 0, %s87
      %s102 = sphi 0, %s88
      %s110 = sphi 0, %s112
      %s113 = sphi 0, %s110
      %s114 = sphi 0, %s113
      %s130 = sphi 0, %s114
    $region4: #{tpu_custom_call.1} parent=1 // loop_header_branch
      %19 = sbr.rel (%p17) target = $region8
    $region5: #{tpu_custom_call.1} parent=1 // loop_body
      %s21 = ssub.s32 %s16, 1
      %s22 = ssub.s32 %s16, 2
      %s29 = sadd.s32 1, %s24
      %p30 = scmp.ge.s32.totalorder %s29, 1
      %s31 = scalar_select %p30, 0, %s29
      %s32 = sadd.s32 1, %s23
      %s33 = scalar_select %p30, %s32, %s23
      %p34 = scmp.ge.s32.totalorder %s33, 2
      %s35 = scalar_select %p34, 0, %s33
      %s36 = ssub.s32 %s23, %s35
      %s37 = ssub.s32 %s24, %s31
      %s38 = sor.u32 %s36, %s37
      %p39 = scmp.eq.s32.totalorder %s38, 0
      %s41 = sadd.s32 %s40, 1
      %s42 = scalar_select %p39, %s40, %s41
      %p45 = pneg %p39
      %p46 = scmp.eq.s32.totalorder %s16, 1
      %p47 = por %p45, %p46
      %p48 = scmp.ne.s32.totalorder %s40, %s43
      %p49 = scmp.eq.s32.totalorder %s16, 0
      %p50 = por %p48, %p49
      %p51 = scmp.ne.s32.totalorder %s40, %s43
      %p52 = scmp.eq.s32.totalorder %s21, 1
      %p53 = por %p51, %p52
      %p54 = scmp.ne.s32.totalorder %s43, %s44
      %p55 = scmp.eq.s32.totalorder %s21, 0
      %p56 = por %p54, %p55
      %p57 = scmp.ne.s32.totalorder %s43, %s44
      %p58 = scmp.eq.s32.totalorder %s22, 1
      %p59 = por %p57, %p58
      %p61 = scmp.ne.s32.totalorder %s44, %s60
      %p62 = scmp.eq.s32.totalorder %s22, 0
      %p63 = por %p61, %p62
      %s65 = sadd.s32 %s64, 1
      %p68 = scmp.eq.s32.totalorder %s16, 1
      %p69 = scmp.ne.s32.totalorder %s64, %s66
      %p70 = scmp.eq.s32.totalorder %s16, 0
      %p71 = por %p69, %p70
      %p72 = scmp.ne.s32.totalorder %s64, %s66
      %p73 = scmp.eq.s32.totalorder %s21, 1
      %p74 = por %p72, %p73
      %p75 = scmp.ne.s32.totalorder %s66, %s67
      %p76 = scmp.eq.s32.totalorder %s21, 0
      %p77 = por %p75, %p76
      %p78 = scmp.ne.s32.totalorder %s66, %s67
      %p79 = scmp.eq.s32.totalorder %s22, 1
      %p80 = por %p78, %p79
      %p82 = scmp.ne.s32.totalorder %s67, %s81
      %p83 = scmp.eq.s32.totalorder %s22, 0
      %p84 = por %p82, %p83
      %s86 = sadd.s32 %s85, 1
      %p89 = scmp.eq.s32.totalorder %s16, 1
      %p90 = scmp.ne.s32.totalorder %s85, %s87
      %p91 = scmp.eq.s32.totalorder %s16, 0
      %p92 = por %p90, %p91
      %p93 = scmp.ne.s32.totalorder %s85, %s87
      %p94 = scmp.eq.s32.totalorder %s21, 1
      %p95 = por %p93, %p94
      %p96 = scmp.ne.s32.totalorder %s87, %s88
      %p97 = scmp.eq.s32.totalorder %s21, 0
      %p98 = por %p96, %p97
      %p99 = scmp.ne.s32.totalorder %s87, %s88
      %p100 = scmp.eq.s32.totalorder %s22, 1
      %p101 = por %p99, %p100
      %p103 = scmp.ne.s32.totalorder %s88, %s102
      %p104 = scmp.eq.s32.totalorder %s22, 0
      %p105 = por %p103, %p104
      %s106 = ssub.s32 %s23, %s35
      %s107 = ssub.s32 %s24, %s31
      %s108 = sor.u32 %s106, %s107
      %p109 = scmp.eq.s32.totalorder %s108, 0
      %s111 = sadd.s32 %s110, 1
      %s112 = scalar_select %p109, %s110, %s111
      %p115 = pneg %p109
      %p116 = scmp.eq.s32.totalorder %s16, 1
      %p117 = por %p115, %p116
      %p118 = scmp.ne.s32.totalorder %s110, %s113
      %p119 = scmp.eq.s32.totalorder %s16, 0
      %p120 = por %p118, %p119
      %p121 = scmp.ne.s32.totalorder %s110, %s113
      %p122 = scmp.eq.s32.totalorder %s21, 1
      %p123 = por %p121, %p122
      %p124 = scmp.ne.s32.totalorder %s113, %s114
      %p125 = scmp.eq.s32.totalorder %s21, 0
      %p126 = por %p124, %p125
      %p127 = scmp.ne.s32.totalorder %s113, %s114
      %p128 = scmp.eq.s32.totalorder %s22, 1
      %p129 = por %p127, %p128
      %p131 = scmp.ne.s32.totalorder %s114, %s130
      %p132 = scmp.eq.s32.totalorder %s22, 0
      %p133 = por %p131, %p132
      %p134 = scmp.le.s32.totalorder 1, %s16
      %p135 = scmp.lt.s32.totalorder %s16, 3
      %p136 = pnand %p134, %p135
      %p137 = pneg %p136
      // Predicated region
      $region9: #{tpu_custom_call.1} parent=5 // pred_check
        _
      $region10: #{tpu_custom_call.1} parent=5 // pred_check_branch
        %139 = sbr.rel (%p136) target = $region12
      $region11: #{tpu_custom_call.1} parent=5 // pred_region
        %s140 = ssub.s32 %s16, 1
        // Predicated region
        $region13: #{tpu_custom_call.1} parent=11 // pred_check
          %p141 = pneg %p77
        $region14: #{tpu_custom_call.1} parent=11 // pred_check_branch
          %143 = sbr.rel (%p141) target = $region16
        $region15: #{tpu_custom_call.1} parent=11 // pred_region
          %s145 = ssub.s32 1024, 1024
          %146 = vsyncadd [#allocation7], %s145
          %s147 = sshll.u32 [#allocation6], 4
          %s148 = int_to_ptr.vmem [resolvable:$true] %s147
          %153 = dma.hbm_to_vmem [thread:$0]  %s1, 1024, %s148, [#allocation7], 128, 128, 8
        $region16: #{tpu_custom_call.1} parent=11 // pred_fallthru
          _
        // Predicated region
        $region17: #{tpu_custom_call.1} parent=11 // pred_check
          %p154 = pneg %p98
        $region18: #{tpu_custom_call.1} parent=11 // pred_check_branch
          %156 = sbr.rel (%p154) target = $region20
        $region19: #{tpu_custom_call.1} parent=11 // pred_region
          %s158 = ssub.s32 1024, 1024
          %159 = vsyncadd [#allocation7], %s158
          %s160 = sshll.u32 [#allocation8], 4
          %s161 = int_to_ptr.vmem [resolvable:$true] %s160
          %166 = dma.hbm_to_vmem [thread:$0]  %s2, 1024, %s161, [#allocation7], 64, 64, 4
        $region20: #{tpu_custom_call.1} parent=11 // pred_fallthru
          _
      $region12: #{tpu_custom_call.1} parent=5 // pred_fallthru
        _
      %p167 = scmp.lt.s32.totalorder %s16, 2
      // Predicated region
      $region21: #{tpu_custom_call.1} parent=5 // pred_check
        %p168 = pneg %p167
      $region22: #{tpu_custom_call.1} parent=5 // pred_check_branch
        %170 = sbr.rel (%p168) target = $region24
      $region23: #{tpu_custom_call.1} parent=5 // pred_region
        // Predicated region
        $region25: #{tpu_custom_call.1} parent=23 // pred_check
          %p171 = pneg %p50
        $region26: #{tpu_custom_call.1} parent=23 // pred_check_branch
          %173 = sbr.rel (%p171) target = $region28
        $region27: #{tpu_custom_call.1} parent=23 // pred_region
          %s174 = sand.u32 %s40, 1
          %s175 = scalar_lea.sflag [#allocation4], %s174
          %s176 = sand.u32 %s40, 1
          %s177 = smul.addr %s176, 32
          %s178 = scalar_lea.vmem [#allocation3], %s177
          %s179 = smul.u32 2, %s24
          %s181 = ssub.s32 512, 512
          %182 = vsyncadd %s175, %s181
          %s183 = smul.addr %s23, 8
          %s184 = sadd.s32 %s179, %s183
          %s185 = smul.addr %s184, 64
          %s186 = scalar_lea.hbm %s0, %s185
          %s187 = sshll.u32 %s178, 4
          %s188 = int_to_ptr.vmem [resolvable:$true] %s187
          %193 = dma.hbm_to_vmem [thread:$0]  %s186, 512, %s188, %s175, 64, 64, 4
        $region28: #{tpu_custom_call.1} parent=23 // pred_fallthru
          _
      $region24: #{tpu_custom_call.1} parent=5 // pred_fallthru
        _
      %p194 = scmp.le.s32.totalorder 1, %s16
      %p195 = scmp.lt.s32.totalorder %s16, 3
      %p196 = pnand %p194, %p195
      %p197 = pneg %p196
      // Predicated region
      $region29: #{tpu_custom_call.1} parent=5 // pred_check
        _
      $region30: #{tpu_custom_call.1} parent=5 // pred_check_branch
        %199 = sbr.rel (%p196) target = $region32
      $region31: #{tpu_custom_call.1} parent=5 // pred_region
        %s200 = ssub.s32 %s16, 1
        %s201 = sand.u32 %s43, 1
        %s202 = scalar_lea.sflag [#allocation4], %s201
        %s203 = sand.u32 %s43, 1
        %s204 = smul.addr %s203, 32
        %s205 = scalar_lea.vmem [#allocation3], %s204
        // Predicated region
        $region33: #{tpu_custom_call.1} parent=31 // pred_check
          %p206 = pneg %p56
        $region34: #{tpu_custom_call.1} parent=31 // pred_check_branch
          %208 = sbr.rel (%p206) target = $region36
        $region35: #{tpu_custom_call.1} parent=31 // pred_region
          %209 = dma.done %s202, 512
        $region36: #{tpu_custom_call.1} parent=31 // pred_fallthru
          _
        // Predicated region
        $region37: #{tpu_custom_call.1} parent=31 // pred_check
          %p210 = pneg %p77
        $region38: #{tpu_custom_call.1} parent=31 // pred_check_branch
          %212 = sbr.rel (%p210) target = $region40
        $region39: #{tpu_custom_call.1} parent=31 // pred_region
          %213 = dma.done [#allocation7], 1024
        $region40: #{tpu_custom_call.1} parent=31 // pred_fallthru
          _
        // Predicated region
        $region41: #{tpu_custom_call.1} parent=31 // pred_check
          %p214 = pneg %p98
        $region42: #{tpu_custom_call.1} parent=31 // pred_check_branch
          %216 = sbr.rel (%p214) target = $region44
        $region43: #{tpu_custom_call.1} parent=31 // pred_region
          %217 = dma.done [#allocation7], 1024
        $region44: #{tpu_custom_call.1} parent=31 // pred_fallthru
          _
        %s218 = sand.u32 %s43, 1
        %s219 = scalar_lea.sflag [#allocation4], %s218
        %s220 = sand.u32 %s43, 1
        %s221 = smul.addr %s220, 32
        %s222 = scalar_lea.vmem [#allocation3], %s221
        %p223 = pneg %p56
        %p224 = pneg %p53
        %p225 = pneg %p77
        %p226 = pneg %p74
        %p227 = pneg %p98
        %p228 = pneg %p95
        %p229 = pneg %p126
        %p230 = pneg %p123
        %s231 = sand.u32 %s113, 1
        %s232 = scalar_lea.sflag [#allocation5], %s231
        %s233 = sand.u32 %s113, 1
        %s234 = smul.addr %s233, 112
        %s235 = scalar_lea.vmem [#allocation9], %s234
        %s236 = smul.u32 2, %s26
        %s237 = smul.u32 2, %s26
        %v239 = vld [vmem:[%s205] sm:$0xf]
        %v240 = vld [vmem:[%s205 + $0x4] sm:$0xf]
        %v241 = vld [vmem:[%s205 + $0x8] sm:$0xf]
        %v242 = vld [vmem:[%s205 + $0xc] sm:$0xf]
        %v243 = vld [vmem:[%s205 + $0x10] sm:$0xf]
        %v244 = vld [vmem:[%s205 + $0x14] sm:$0xf]
        %v245 = vld [vmem:[%s205 + $0x18] sm:$0xf]
        %v246 = vld [vmem:[%s205 + $0x1c] sm:$0xf]
        %v247 = vld [vmem:[#allocation6] sm:$0xff]
        %v248 = vld [vmem:[#allocation6 + $0x8] sm:$0xff]
        %v249 = vld [vmem:[#allocation6 + $0x10] sm:$0xff]
        %v250 = vld [vmem:[#allocation6 + $0x18] sm:$0xff]
        %v251 = vld [vmem:[#allocation6 + $0x20] sm:$0xff]
        %v252 = vld [vmem:[#allocation6 + $0x28] sm:$0xff]
        %v253 = vld [vmem:[#allocation6 + $0x30] sm:$0xff]
        %v254 = vld [vmem:[#allocation6 + $0x38] sm:$0xff]
        %v263 = vunpack.c.l.b16 %v239
        %v264 = vunpack.c.l.b16 %v240
        %v265 = vunpack.c.l.b16 %v241
        %v266 = vunpack.c.l.b16 %v242
        %v267 = vunpack.c.l.b16 %v243
        %v268 = vunpack.c.l.b16 %v244
        %v269 = vunpack.c.l.b16 %v245
        %v270 = vunpack.c.l.b16 %v246
        %v271 = vpack.c.b16 %v264, %v263
        %v272 = vpack.c.b16 %v266, %v265
        %v273 = vpack.c.b16 %v268, %v267
        %v274 = vpack.c.b16 %v270, %v269
        %v283 = vunpack.c.l.b16 %v247
        %v284 = vunpack.c.h.b16 %v247
        %v285 = vunpack.c.l.b16 %v248
        %v286 = vunpack.c.h.b16 %v248
        %v287 = vunpack.c.l.b16 %v249
        %v288 = vunpack.c.h.b16 %v249
        %v289 = vunpack.c.l.b16 %v250
        %v290 = vunpack.c.h.b16 %v250
        %v291 = vunpack.c.l.b16 %v251
        %v292 = vunpack.c.h.b16 %v251
        %v293 = vunpack.c.l.b16 %v252
        %v294 = vunpack.c.h.b16 %v252
        %v295 = vunpack.c.l.b16 %v253
        %v296 = vunpack.c.h.b16 %v253
        %v297 = vunpack.c.l.b16 %v254
        %v298 = vunpack.c.h.b16 %v254
        %v299 = vpack.c.b16 %v285, %v283
        %v300 = vpack.c.b16 %v286, %v284
        %v301 = vpack.c.b16 %v289, %v287
        %v302 = vpack.c.b16 %v290, %v288
        %v303 = vpack.c.b16 %v293, %v291
        %v304 = vpack.c.b16 %v294, %v292
        %v305 = vpack.c.b16 %v297, %v295
        %v306 = vpack.c.b16 %v298, %v296
        %vm315 = vcmask 523264
        %v317 = vsel %vm315, %v271, 0
        %v320 = vsel %vm315, %v272, 0
        %v323 = vsel %vm315, %v273, 0
        %v326 = vsel %vm315, %v274, 0
        %328 = vmatprep.subr.bf16.mxu0 0
        %329 = vmatpush1.bf16.msra.mxu0 0
        %330 = vmatprep.subr.bf16.mxu0 0
        %331 = vmatpush1.bf16.msra.mxu0 0
        %332 = vmatprep.subr.bf16.mxu0 0
        %333 = vmatpush1.bf16.msra.mxu0 0
        %334 = vmatprep.subr.bf16.mxu0 0
        %335 = vmatpush1.bf16.msra.mxu0 0
        %336 = vmatprep.subr.bf16.mxu0 %v306
        %337 = vmatpush1.bf16.msra.mxu0 %v305
        %338 = vmatprep.subr.bf16.mxu0 %v304
        %339 = vmatpush1.bf16.msra.mxu0 %v303
        %340 = vmatprep.subr.bf16.mxu0 %v302
        %341 = vmatpush1.bf16.msra.mxu0 %v301
        %342 = vmatprep.subr.bf16.mxu0 %v300
        %343 = vmatpush1.bf16.msra.mxu0 %v299
        %344 = vmatprep.subr.bf16.mxu0 0
        %345 = vmatpush2.bf16.msra.mxu0 0
        %346 = vmatprep.subr.bf16.mxu0 0
        %347 = vmatpush2.bf16.msra.mxu0 0
        %348 = vmatprep.subr.bf16.mxu0 0
        %349 = vmatpush2.bf16.msra.mxu0 0
        %350 = vmatprep.subr.bf16.mxu0 0
        %351 = vmatpush2.bf16.msra.mxu0 0
        %352 = vmatprep.subr.bf16.mxu0 0
        %353 = vmatpush2.bf16.msra.mxu0 0
        %354 = vmatprep.subr.bf16.mxu0 0
        %355 = vmatpush2.bf16.msra.mxu0 0
        %356 = vmatprep.subr.bf16.mxu0 0
        %357 = vmatpush2.bf16.msra.mxu0 0
        %358 = vmatprep.subr.bf16.mxu0 0
        %359 = vmatpush2.bf16.msra.mxu0 0
        %360 = vmatprep.mubr.bf16.mxu0 0
        %361 = vmatmul.mubr.bf16.gmra.mxu0 %v317
        %v362 = vpop.f32.mrf.mxu0
        %v363 = vadd.f32 0.0, %v362
        %v364 = vpop.f32.mrf.mxu0
        %v365 = vadd.f32 0.0, %v364
        %v366 = vpop.f32.mrf.mxu0
        %v367 = vadd.f32 0.0, %v366
        %v368 = vpop.f32.mrf.mxu0
        %v369 = vadd.f32 0.0, %v368
        %370 = vmatprep.mubr.bf16.mxu0 0
        %371 = vmatmul.mubr.bf16.gmra.mxu0 %v320
        %v372 = vpop.f32.mrf.mxu0
        %v373 = vadd.f32 0.0, %v372
        %v374 = vpop.f32.mrf.mxu0
        %v375 = vadd.f32 0.0, %v374
        %v376 = vpop.f32.mrf.mxu0
        %v377 = vadd.f32 0.0, %v376
        %v378 = vpop.f32.mrf.mxu0
        %v379 = vadd.f32 0.0, %v378
        %380 = vmatprep.mubr.bf16.mxu0 0
        %381 = vmatmul.mubr.bf16.gmra.mxu0 %v323
        %v382 = vpop.f32.mrf.mxu0
        %v383 = vadd.f32 0.0, %v382
        %v384 = vpop.f32.mrf.mxu0
        %v385 = vadd.f32 0.0, %v384
        %v386 = vpop.f32.mrf.mxu0
        %v387 = vadd.f32 0.0, %v386
        %v388 = vpop.f32.mrf.mxu0
        %v389 = vadd.f32 0.0, %v388
        %390 = vmatprep.mubr.bf16.mxu0 0
        %391 = vmatmul.mubr.bf16.gmra.mxu0 %v326
        %v392 = vpop.f32.mrf.mxu0
        %v393 = vadd.f32 0.0, %v392
        %v394 = vpop.f32.mrf.mxu0
        %v395 = vadd.f32 0.0, %v394
        %v396 = vpop.f32.mrf.mxu0
        %v397 = vadd.f32 0.0, %v396
        %v398 = vpop.f32.mrf.mxu0
        %v399 = vadd.f32 0.0, %v398
        %400 = vdwg.mxu0
        %v401 = vmul.f32 %v363, %v363
        %v402 = vmul.f32 %v367, %v367
        %v403 = vmul.f32 %v373, %v373
        %v404 = vmul.f32 %v377, %v377
        %v405 = vmul.f32 %v383, %v383
        %v406 = vmul.f32 %v387, %v387
        %v407 = vmul.f32 %v393, %v393
        %v408 = vmul.f32 %v397, %v397
        %v409 = vmul.f32 %v365, %v365
        %v410 = vmul.f32 %v369, %v369
        %v411 = vmul.f32 %v375, %v375
        %v412 = vmul.f32 %v379, %v379
        %v413 = vmul.f32 %v385, %v385
        %v414 = vmul.f32 %v389, %v389
        %v415 = vmul.f32 %v395, %v395
        %v416 = vmul.f32 %v399, %v399
        %v417 = vadd.f32 %v401, %v409
        %v418 = vadd.f32 %v402, %v410
        %v419 = vadd.f32 %v403, %v411
        %v420 = vadd.f32 %v404, %v412
        %v421 = vadd.f32 %v405, %v413
        %v422 = vadd.f32 %v406, %v414
        %v423 = vadd.f32 %v407, %v415
        %v424 = vadd.f32 %v408, %v416
        %v425 = vpack.c.bf16 %v418, %v417
        %v426 = vpack.c.bf16 %v420, %v419
        %v427 = vpack.c.bf16 %v422, %v421
        %v428 = vpack.c.bf16 %v424, %v423
        %v433 = vunpack.c.l.b16 %v425
        %v434 = vunpack.c.h.b16 %v425
        %v435 = vunpack.c.l.b16 %v426
        %v436 = vunpack.c.h.b16 %v426
        %v437 = vunpack.c.l.b16 %v427
        %v438 = vunpack.c.h.b16 %v427
        %v439 = vunpack.c.l.b16 %v428
        %v440 = vunpack.c.h.b16 %v428
        %v441 = vpack.c.b16 %v433, %v433
        %v442 = vpack.c.b16 %v434, %v434
        %v443 = vpack.c.b16 %v435, %v435
        %v444 = vpack.c.b16 %v436, %v436
        %v445 = vpack.c.b16 %v437, %v437
        %v446 = vpack.c.b16 %v438, %v438
        %v447 = vpack.c.b16 %v439, %v439
        %v448 = vpack.c.b16 %v440, %v440
        %457 = vst [vmem:[#allocation2] sm:$0xf] %v441
        %458 = vst [vmem:[#allocation2 + $0x4] sm:$0xf] %v442
        %459 = vst [vmem:[#allocation2 + $0x8] sm:$0xf] %v443
        %460 = vst [vmem:[#allocation2 + $0xc] sm:$0xf] %v444
        %461 = vst [vmem:[#allocation2 + $0x10] sm:$0xf] %v445
        %462 = vst [vmem:[#allocation2 + $0x14] sm:$0xf] %v446
        %463 = vst [vmem:[#allocation2 + $0x18] sm:$0xf] %v447
        %464 = vst [vmem:[#allocation2 + $0x1c] sm:$0xf] %v448
        %v465 = vmul.f32 %v363, %v373
        %v466 = vmul.f32 %v367, %v377
        %v467 = vmul.f32 %v365, %v375
        %v468 = vmul.f32 %v369, %v379
        %v469 = vadd.f32 %v465, %v467
        %v470 = vadd.f32 %v466, %v468
        %v471 = vmul.f32 %v363, %v383
        %v472 = vmul.f32 %v367, %v387
        %v473 = vmul.f32 %v365, %v385
        %v474 = vmul.f32 %v369, %v389
        %v475 = vadd.f32 %v471, %v473
        %v476 = vadd.f32 %v472, %v474
        %v477 = vmul.f32 %v363, %v393
        %v478 = vmul.f32 %v367, %v397
        %v479 = vmul.f32 %v365, %v395
        %v480 = vmul.f32 %v369, %v399
        %v481 = vadd.f32 %v477, %v479
        %v482 = vadd.f32 %v478, %v480
        %v483 = vmul.f32 %v469, %v469
        %v484 = vmul.f32 %v470, %v470
        %v485 = vmul.f32 %v475, %v475
        %v486 = vmul.f32 %v476, %v476
        %v487 = vadd.f32 %v483, %v485
        %v488 = vadd.f32 %v484, %v486
        %v489 = vmul.f32 %v481, %v481
        %v490 = vmul.f32 %v482, %v482
        %v491 = vadd.f32 %v487, %v489
        %v492 = vadd.f32 %v488, %v490
        %v493 = vrsqrt.pop %v491
        %v494 = vmul.f32 %v491, %v493
        %vm495 = vcmp.eq.f32.partialorder %v491, inf
        %v496 = vsel %vm495, %v491, %v494
        %vm497 = vcmp.eq.f32.partialorder %v491, 0.0
        %v498 = vand.u32 %v491, 2147483648
        %v499 = vsel %vm497, %v498, %v496
        %v500 = vrsqrt.pop %v492
        %v501 = vmul.f32 %v492, %v500
        %vm502 = vcmp.eq.f32.partialorder %v492, inf
        %v503 = vsel %vm502, %v492, %v501
        %vm504 = vcmp.eq.f32.partialorder %v492, 0.0
        %v505 = vand.u32 %v492, 2147483648
        %v506 = vsel %vm504, %v505, %v503
        %v507 = vadd.f32 %v499, 1.1920929e-07
        %v508 = vadd.f32 %v506, 1.1920929e-07
        %v509 = vrcp.pop %v507
        %v510 = vrcp.pop %v508
        %v511 = vmul.f32 %v507, %v509
        %v512 = vmul.f32 %v508, %v510
        %v513 = vsub.f32 2.0, %v511
        %v514 = vsub.f32 2.0, %v512
        %v515 = vmul.f32 %v509, %v513
        %v516 = vmul.f32 %v510, %v514
        %v517 = vmul.f32 %v469, %v515
        %v518 = vmul.f32 %v470, %v516
        %v519 = vpack.c.bf16 %v518, %v517
        %v521 = vunpack.c.l.b16 %v519
        %v522 = vunpack.c.h.b16 %v519
        %v523 = vpack.c.b16 %v521, %v521
        %v524 = vpack.c.b16 %v522, %v522
        %527 = vst [vmem:[#allocation2 + $0x20] sm:$0xf] %v523
        %528 = vst [vmem:[#allocation2 + $0x24] sm:$0xf] %v524
        %v529 = vmul.f32 %v475, %v515
        %v530 = vmul.f32 %v476, %v516
        %v531 = vpack.c.bf16 %v530, %v529
        %v533 = vunpack.c.l.b16 %v531
        %v534 = vunpack.c.h.b16 %v531
        %v535 = vpack.c.b16 %v533, %v533
        %v536 = vpack.c.b16 %v534, %v534
        %539 = vst [vmem:[#allocation2 + $0x28] sm:$0xf] %v535
        %540 = vst [vmem:[#allocation2 + $0x2c] sm:$0xf] %v536
        %v541 = vmul.f32 %v481, %v515
        %v542 = vmul.f32 %v482, %v516
        %v543 = vpack.c.bf16 %v542, %v541
        %v545 = vunpack.c.l.b16 %v543
        %v546 = vunpack.c.h.b16 %v543
        %v547 = vpack.c.b16 %v545, %v545
        %v548 = vpack.c.b16 %v546, %v546
        %551 = vst [vmem:[#allocation2 + $0x30] sm:$0xf] %v547
        %552 = vst [vmem:[#allocation2 + $0x34] sm:$0xf] %v548
        %v553 = vld [vmem:[#allocation2] sm:$0xf]
        %v554 = vld [vmem:[#allocation2 + $0x4] sm:$0xf]
        %v555 = vld [vmem:[#allocation2 + $0x8] sm:$0xf]
        %v556 = vld [vmem:[#allocation2 + $0xc] sm:$0xf]
        %v557 = vld [vmem:[#allocation2 + $0x10] sm:$0xf]
        %v558 = vld [vmem:[#allocation2 + $0x14] sm:$0xf]
        %v559 = vld [vmem:[#allocation2 + $0x18] sm:$0xf]
        %v560 = vld [vmem:[#allocation2 + $0x1c] sm:$0xf]
        %v561 = vld [vmem:[#allocation2 + $0x20] sm:$0xf]
        %v562 = vld [vmem:[#allocation2 + $0x24] sm:$0xf]
        %v563 = vld [vmem:[#allocation2 + $0x28] sm:$0xf]
        %v564 = vld [vmem:[#allocation2 + $0x2c] sm:$0xf]
        %v565 = vld [vmem:[#allocation2 + $0x30] sm:$0xf]
        %v566 = vld [vmem:[#allocation2 + $0x34] sm:$0xf]
        %v567 = vld [vmem:[#allocation8] sm:$0xf]
        %v568 = vld [vmem:[#allocation8 + $0x4] sm:$0xf]
        %v569 = vld [vmem:[#allocation8 + $0x8] sm:$0xf]
        %v570 = vld [vmem:[#allocation8 + $0xc] sm:$0xf]
        %v571 = vld [vmem:[#allocation8 + $0x10] sm:$0xf]
        %v572 = vld [vmem:[#allocation8 + $0x14] sm:$0xf]
        %v573 = vld [vmem:[#allocation8 + $0x18] sm:$0xf]
        %v574 = vld [vmem:[#allocation8 + $0x1c] sm:$0xf]
        %v575 = vld [vmem:[#allocation8 + $0x20] sm:$0xf]
        %v576 = vld [vmem:[#allocation8 + $0x24] sm:$0xf]
        %v577 = vld [vmem:[#allocation8 + $0x28] sm:$0xf]
        %v578 = vld [vmem:[#allocation8 + $0x2c] sm:$0xf]
        %v579 = vld [vmem:[#allocation8 + $0x30] sm:$0xf]
        %v580 = vld [vmem:[#allocation8 + $0x34] sm:$0xf]
        %v581 = vld [vmem:[#allocation8 + $0x38] sm:$0xf]
        %v582 = vld [vmem:[#allocation8 + $0x3c] sm:$0xf]
        %v597 = vunpack.c.l.b16 %v553
        %v598 = vunpack.c.l.b16 %v554
        %v599 = vunpack.c.l.b16 %v555
        %v600 = vunpack.c.l.b16 %v556
        %v601 = vunpack.c.l.b16 %v557
        %v602 = vunpack.c.l.b16 %v558
        %v603 = vunpack.c.l.b16 %v559
        %v604 = vunpack.c.l.b16 %v560
        %v605 = vunpack.c.l.b16 %v561
        %v606 = vunpack.c.l.b16 %v562
        %v607 = vunpack.c.l.b16 %v563
        %v608 = vunpack.c.l.b16 %v564
        %v609 = vunpack.c.l.b16 %v565
        %v610 = vunpack.c.l.b16 %v566
        %v611 = vpack.c.b16 %v598, %v597
        %v612 = vpack.c.b16 %v600, %v599
        %v613 = vpack.c.b16 %v602, %v601
        %v614 = vpack.c.b16 %v604, %v603
        %v615 = vpack.c.b16 %v606, %v605
        %v616 = vpack.c.b16 %v608, %v607
        %v617 = vpack.c.b16 %v610, %v609
        %v641 = vunpack.c.l.b16 %v567
        %v642 = vunpack.c.l.b16 %v568
        %v643 = vunpack.c.l.b16 %v569
        %v644 = vunpack.c.l.b16 %v570
        %v645 = vunpack.c.l.b16 %v571
        %v646 = vunpack.c.l.b16 %v572
        %v647 = vunpack.c.l.b16 %v573
        %v648 = vunpack.c.l.b16 %v574
        %v649 = vunpack.c.l.b16 %v575
        %v650 = vunpack.c.l.b16 %v576
        %v651 = vunpack.c.l.b16 %v577
        %v652 = vunpack.c.l.b16 %v578
        %v653 = vunpack.c.l.b16 %v579
        %v654 = vunpack.c.l.b16 %v580
        %v655 = vunpack.c.l.b16 %v581
        %v656 = vunpack.c.l.b16 %v582
        %v657 = vpack.c.b16 %v642, %v641
        %v658 = vpack.c.b16 %v644, %v643
        %v659 = vpack.c.b16 %v646, %v645
        %v660 = vpack.c.b16 %v648, %v647
        %v661 = vpack.c.b16 %v650, %v649
        %v662 = vpack.c.b16 %v652, %v651
        %v663 = vpack.c.b16 %v654, %v653
        %v664 = vpack.c.b16 %v656, %v655
        %673 = vmatprep.subr.bf16.mxu0 0
        %674 = vmatpush1.bf16.msra.mxu0 %v664
        %675 = vmatprep.subr.bf16.mxu0 0
        %676 = vmatpush1.bf16.msra.mxu0 %v663
        %677 = vmatprep.subr.bf16.mxu0 0
        %678 = vmatpush1.bf16.msra.mxu0 %v662
        %679 = vmatprep.subr.bf16.mxu0 0
        %680 = vmatpush1.bf16.msra.mxu0 %v661
        %681 = vmatprep.subr.bf16.mxu0 0
        %682 = vmatpush1.bf16.msra.mxu0 %v660
        %683 = vmatprep.subr.bf16.mxu0 0
        %684 = vmatpush1.bf16.msra.mxu0 %v659
        %685 = vmatprep.subr.bf16.mxu0 0
        %686 = vmatpush1.bf16.msra.mxu0 %v658
        %687 = vmatprep.subr.bf16.mxu0 0
        %688 = vmatpush1.bf16.msra.mxu0 %v657
        %689 = vmatprep.subr.bf16.mxu0 0
        %690 = vmatpush2.bf16.msra.mxu0 0
        %691 = vmatprep.subr.bf16.mxu0 0
        %692 = vmatpush2.bf16.msra.mxu0 0
        %693 = vmatprep.subr.bf16.mxu0 0
        %694 = vmatpush2.bf16.msra.mxu0 0
        %695 = vmatprep.subr.bf16.mxu0 0
        %696 = vmatpush2.bf16.msra.mxu0 0
        %697 = vmatprep.subr.bf16.mxu0 0
        %698 = vmatpush2.bf16.msra.mxu0 0
        %699 = vmatprep.subr.bf16.mxu0 0
        %700 = vmatpush2.bf16.msra.mxu0 0
        %701 = vmatprep.subr.bf16.mxu0 0
        %702 = vmatpush2.bf16.msra.mxu0 0
        %703 = vmatprep.subr.bf16.mxu0 0
        %704 = vmatpush2.bf16.msra.mxu0 0
        %705 = vmatprep.mubr.bf16.mxu0 0
        %706 = vmatmul.mubr.bf16.gmra.mxu0 %v611
        %v707 = vpop.f32.mrf.mxu0
        %v708 = vadd.f32 0.0, %v707
        %v709 = vpop.f32.mrf.mxu0
        %v710 = vpop.f32.mrf.mxu0
        %v711 = vadd.f32 0.0, %v710
        %v712 = vpop.f32.mrf.mxu0
        %713 = vmatprep.mubr.bf16.mxu0 0
        %714 = vmatmul.mubr.bf16.gmra.mxu0 %v612
        %v715 = vpop.f32.mrf.mxu0
        %v716 = vadd.f32 0.0, %v715
        %v717 = vpop.f32.mrf.mxu0
        %v718 = vpop.f32.mrf.mxu0
        %v719 = vadd.f32 0.0, %v718
        %v720 = vpop.f32.mrf.mxu0
        %721 = vmatprep.mubr.bf16.mxu0 0
        %722 = vmatmul.mubr.bf16.gmra.mxu0 %v613
        %v723 = vpop.f32.mrf.mxu0
        %v724 = vadd.f32 0.0, %v723
        %v725 = vpop.f32.mrf.mxu0
        %v726 = vpop.f32.mrf.mxu0
        %v727 = vadd.f32 0.0, %v726
        %v728 = vpop.f32.mrf.mxu0
        %729 = vmatprep.mubr.bf16.mxu0 0
        %730 = vmatmul.mubr.bf16.gmra.mxu0 %v614
        %v731 = vpop.f32.mrf.mxu0
        %v732 = vadd.f32 0.0, %v731
        %v733 = vpop.f32.mrf.mxu0
        %v734 = vpop.f32.mrf.mxu0
        %v735 = vadd.f32 0.0, %v734
        %v736 = vpop.f32.mrf.mxu0
        %737 = vmatprep.mubr.bf16.mxu0 0
        %738 = vmatmul.mubr.bf16.gmra.mxu0 %v615
        %v739 = vpop.f32.mrf.mxu0
        %v740 = vadd.f32 0.0, %v739
        %v741 = vpop.f32.mrf.mxu0
        %v742 = vpop.f32.mrf.mxu0
        %v743 = vadd.f32 0.0, %v742
        %v744 = vpop.f32.mrf.mxu0
        %745 = vmatprep.mubr.bf16.mxu0 0
        %746 = vmatmul.mubr.bf16.gmra.mxu0 %v616
        %v747 = vpop.f32.mrf.mxu0
        %v748 = vadd.f32 0.0, %v747
        %v749 = vpop.f32.mrf.mxu0
        %v750 = vpop.f32.mrf.mxu0
        %v751 = vadd.f32 0.0, %v750
        %v752 = vpop.f32.mrf.mxu0
        %753 = vmatprep.mubr.bf16.mxu0 0
        %754 = vmatmul.mubr.bf16.gmra.mxu0 %v617
        %v755 = vpop.f32.mrf.mxu0
        %v756 = vadd.f32 0.0, %v755
        %v757 = vpop.f32.mrf.mxu0
        %v758 = vpop.f32.mrf.mxu0
        %v759 = vadd.f32 0.0, %v758
        %v760 = vpop.f32.mrf.mxu0
        %761 = vdwg.mxu0
        %v762 = vmax.f32 %v708, 1e-10
        %v763 = vmax.f32 %v711, 1e-10
        %v764 = vmax.f32 %v716, 1e-10
        %v765 = vmax.f32 %v719, 1e-10
        %v766 = vmax.f32 %v724, 1e-10
        %v767 = vmax.f32 %v727, 1e-10
        %v768 = vmax.f32 %v732, 1e-10
        %v769 = vmax.f32 %v735, 1e-10
        %v770 = vlog2.pop %v762
        %v771 = vmul.f32 %v770, 0.6931472
        %v772 = vlog2.pop %v763
        %v773 = vmul.f32 %v772, 0.6931472
        %v774 = vlog2.pop %v764
        %v775 = vmul.f32 %v774, 0.6931472
        %v776 = vlog2.pop %v765
        %v777 = vmul.f32 %v776, 0.6931472
        %v778 = vlog2.pop %v766
        %v779 = vmul.f32 %v778, 0.6931472
        %v780 = vlog2.pop %v767
        %v781 = vmul.f32 %v780, 0.6931472
        %v782 = vlog2.pop %v768
        %v783 = vmul.f32 %v782, 0.6931472
        %v784 = vlog2.pop %v769
        %v785 = vmul.f32 %v784, 0.6931472
        %v786 = vmul.f32 %v771, 0.4342945
        %v787 = vmul.f32 %v773, 0.4342945
        %v788 = vmul.f32 %v775, 0.4342945
        %v789 = vmul.f32 %v777, 0.4342945
        %v790 = vmul.f32 %v779, 0.4342945
        %v791 = vmul.f32 %v781, 0.4342945
        %v792 = vmul.f32 %v783, 0.4342945
        %v793 = vmul.f32 %v785, 0.4342945
        %v794 = vmul.f32 %v786, 10.0
        %v795 = vmul.f32 %v787, 10.0
        %v796 = vmul.f32 %v788, 10.0
        %v797 = vmul.f32 %v789, 10.0
        %v798 = vmul.f32 %v790, 10.0
        %v799 = vmul.f32 %v791, 10.0
        %v800 = vmul.f32 %v792, 10.0
        %v801 = vmul.f32 %v793, 10.0
        %802 = vst [vmem:[%s235] sm:$0xff] %v794
        %803 = vst [vmem:[%s235 + $0x8] sm:$0xff] %v795
        %804 = vst [vmem:[%s235 + $0x10] sm:$0xff] %v796
        %805 = vst [vmem:[%s235 + $0x18] sm:$0xff] %v797
        %806 = vst [vmem:[%s235 + $0x20] sm:$0xff] %v798
        %807 = vst [vmem:[%s235 + $0x28] sm:$0xff] %v799
        %808 = vst [vmem:[%s235 + $0x30] sm:$0xff] %v800
        %809 = vst [vmem:[%s235 + $0x38] sm:$0xff] %v801
        %s810 = scalar_lea.vmem %s235, 64 [#allocation9]
        %811 = vst [vmem:[%s810] sm:$0xff] %v740
        %812 = vst [vmem:[%s810 + $0x8] sm:$0xff] %v743
        %813 = vst [vmem:[%s810 + $0x10] sm:$0xff] %v748
        %814 = vst [vmem:[%s810 + $0x18] sm:$0xff] %v751
        %815 = vst [vmem:[%s810 + $0x20] sm:$0xff] %v756
        %816 = vst [vmem:[%s810 + $0x28] sm:$0xff] %v759
        %s817 = sand.u32 %s113, 1
        %s818 = scalar_lea.sflag [#allocation5], %s817
        %s819 = sand.u32 %s113, 1
        %s820 = smul.addr %s819, 112
        %s821 = scalar_lea.vmem [#allocation9], %s820
        // Predicated region
        $region45: #{tpu_custom_call.1} parent=31 // pred_check
          %p822 = pneg %p123
        $region46: #{tpu_custom_call.1} parent=31 // pred_check_branch
          %824 = sbr.rel (%p822) target = $region48
        $region47: #{tpu_custom_call.1} parent=31 // pred_region
          %s825 = smul.u32 2, %s26
          %s827 = ssub.s32 1792, 1792
          %828 = vsyncadd %s818, %s827
          %s829 = smul.addr %s25, 14
          %s830 = sadd.s32 %s825, %s829
          %s831 = smul.addr %s830, 128
          %s832 = scalar_lea.hbm %s3, %s831
          %s833 = sshll.u32 %s821, 4
          %s834 = int_to_ptr.vmem [resolvable:$true] %s833
          %839 = dma.vmem_to_hbm [thread:$0]  %s834, 1792, %s832, %s818, 128, 128, 8
        $region48: #{tpu_custom_call.1} parent=31 // pred_fallthru
          _
      $region32: #{tpu_custom_call.1} parent=5 // pred_fallthru
        _
      %p840 = scmp.le.s32.totalorder 2, %s16
      // Predicated region
      $region49: #{tpu_custom_call.1} parent=5 // pred_check
        %p841 = pneg %p840
      $region50: #{tpu_custom_call.1} parent=5 // pred_check_branch
        %843 = sbr.rel (%p841) target = $region52
      $region51: #{tpu_custom_call.1} parent=5 // pred_region
        %s844 = ssub.s32 %s16, 2
        // Predicated region
        $region53: #{tpu_custom_call.1} parent=51 // pred_check
          %p845 = pneg %p129
        $region54: #{tpu_custom_call.1} parent=51 // pred_check_branch
          %847 = sbr.rel (%p845) target = $region56
        $region55: #{tpu_custom_call.1} parent=51 // pred_region
          %s848 = sand.u32 %s114, 1
          %s849 = scalar_lea.sflag [#allocation5], %s848
          %s850 = sand.u32 %s114, 1
          %s851 = smul.addr %s850, 112
          %s852 = scalar_lea.vmem [#allocation9], %s851
          %853 = dma.done %s849, 1792
        $region56: #{tpu_custom_call.1} parent=51 // pred_fallthru
          _
      $region52: #{tpu_custom_call.1} parent=5 // pred_fallthru
        _
    $region6: #{tpu_custom_call.1} parent=1 // loop_footer
      %s20 = sadd.s32 1, %s16
    $region7: #{tpu_custom_call.1} parent=1 // loop_footer_branch
      %15 = sbr.rel target = $region3
    $region8: #{tpu_custom_call.1} parent=1 // loop_exit
      _
    %854 = vsyncpa [#allocation4], 1
    %s855 = scalar_lea.sflag [#allocation4], 1
    %856 = vsyncpa %s855, 1
    %857 = vsyncpa [#allocation7], 1
    %858 = vsyncpa [#allocation5], 1
    %s859 = scalar_lea.sflag [#allocation5], 1
    %860 = vsyncpa %s859, 1

</llo_original>
